<compile_context>
chip_gen: v7x
topology: tpu7x:2x2x1
jax: 0.10.0
libtpu: 0.0.40
codegen_flags: <defaults>
</compile_context>

<pallas_src>
import jax
import jax.numpy as jnp
from jax.experimental import pallas as pl
from jax.experimental.pallas import tpu as pltpu

DIM = 256          # dim (module default)
HIDDEN = 256       # hidden_dim is overridden to 256 inside __init__


def swiglu_kernel(x_ref, w13_ref, b13_ref, w2_ref, b2_ref, o_ref):
    x = x_ref[...]                                        # bf16 (tile_m, D)
    H = w2_ref.shape[0]

    # Fused gate+linear branch: x @ [W1 | W3] + [b1 | b3], f32 accumulation.
    h13 = jnp.dot(x, w13_ref[...], preferred_element_type=jnp.float32) + b13_ref[...]
    h1 = h13[:, :H]                                       # gate pre-activation
    h3 = h13[:, H:]                                       # linear branch

    # silu(h1) = h1 * sigmoid(h1); reciprocal goes to the EUP slot.
    gate = h1 * pl.reciprocal(1.0 + jnp.exp(-h1), approx=True)

    # elementwise product, cast back to bf16 for the projection matmul
    h = (gate * h3).astype(w2_ref.dtype)

    # projection: h @ W2 + b2   (dropout = identity in eval mode)
    out = jnp.dot(h, w2_ref[...], preferred_element_type=jnp.float32) + b2_ref[...]
    o_ref[...] = out.astype(o_ref.dtype)


def swiglu(x, w1, b1, w3, b3, w2, b2, *, tile_m=512):
    """x: (M, DIM) f32. Weights (in, out); biases (1, out). Returns f32 (M, DIM)."""
    M, D = x.shape
    H = w1.shape[1]

    # Single grid step when M is small; otherwise stream M in tile_m chunks.
    tile_m = min(tile_m, M)
    assert M % tile_m == 0, f"M={M} must be divisible by tile_m={tile_m}"
    # bf16 sublane packing wants the second-minor tile dim to be a multiple of 16
    assert tile_m % 16 == 0, f"tile_m={tile_m} must be a multiple of 16 for bf16"

    # Fuse the two up-projections into one weight so the kernel does a single
    # (tile_m, D) x (D, 2H) matmul for both branches.
    w13 = jnp.concatenate([w1, w3], axis=1).astype(jnp.bfloat16)   # (D, 2H)
    b13 = jnp.concatenate([b1, b3], axis=1)                         # (1, 2H) f32

    x_bf = x.astype(jnp.bfloat16)
    w2_bf = w2.astype(jnp.bfloat16)

    grid = (M // tile_m,)
    return pl.pallas_call(
        swiglu_kernel,
        out_shape=jax.ShapeDtypeStruct((M, D), x.dtype),
        grid_spec=pltpu.PrefetchScalarGridSpec(
            num_scalar_prefetch=0,
            grid=grid,
            in_specs=[
                pl.BlockSpec((tile_m, D), lambda i: (i, 0)),    # x tile (streams)
                pl.BlockSpec((D, 2 * H), lambda i: (0, 0)),     # [W1|W3] (resident)
                pl.BlockSpec((1, 2 * H), lambda i: (0, 0)),     # [b1|b3]
                pl.BlockSpec((H, D), lambda i: (0, 0)),         # W2
                pl.BlockSpec((1, D), lambda i: (0, 0)),         # b2
            ],
            out_specs=pl.BlockSpec((tile_m, D), lambda i: (i, 0)),
        ),
        compiler_params=pltpu.CompilerParams(
            dimension_semantics=("parallel",)),
    )(x_bf, w13, b13, w2_bf, b2)


def swiglu_ref(x, w1, b1, w3, b3, w2, b2):
    h1 = x @ w1 + b1
    gate = h1 * jax.nn.sigmoid(h1)
    h = gate * (x @ w3 + b3)
    return h @ w2 + b2


if __name__ == "__main__":
    key = jax.random.PRNGKey(0)
    k_x, k1, kb1, k3, kb3, k2, kb2 = jax.random.split(key, 7)

    batch, seq = 2, 8
    x = jax.random.normal(k_x, (batch, seq, DIM), dtype=jnp.float32)

    # Deterministic parameter init (Linear-like scale), stored as (in, out).
    scale_in = 1.0 / jnp.sqrt(DIM)
    scale_h = 1.0 / jnp.sqrt(HIDDEN)
    w1 = jax.random.uniform(k1, (DIM, HIDDEN), minval=-scale_in, maxval=scale_in)
    b1 = jax.random.uniform(kb1, (1, HIDDEN), minval=-scale_in, maxval=scale_in)
    w3 = jax.random.uniform(k3, (DIM, HIDDEN), minval=-scale_in, maxval=scale_in)
    b3 = jax.random.uniform(kb3, (1, HIDDEN), minval=-scale_in, maxval=scale_in)
    w2 = jax.random.uniform(k2, (HIDDEN, DIM), minval=-scale_h, maxval=scale_h)
    b2 = jax.random.uniform(kb2, (1, DIM), minval=-scale_h, maxval=scale_h)

    x2d = x.reshape(batch * seq, DIM)

    out = swiglu(x2d, w1, b1, w3, b3, w2, b2)
    out = jax.block_until_ready(out)
    out = out.reshape(batch, seq, DIM)

    # Reference in full f32; bf16 operands -> loosen tolerance accordingly.
    ref = swiglu_ref(x2d, w1, b1, w3, b3, w2, b2).reshape(batch, seq, DIM)
    assert out.shape == (batch, seq, DIM)
    assert jnp.allclose(out, ref, atol=3e-2, rtol=3e-2), float(
        jnp.max(jnp.abs(out - ref)))

    print("KERNEL_OK")
</pallas_src>

<mosaic_0001>
module attributes {stable_mosaic.version = 11 : i64} {
  func.func @swiglu_kernel(%arg0: i32, %arg1: memref<16x256xbf16, #tpu.memory_space<vmem>>, %arg2: memref<256x512xbf16, #tpu.memory_space<vmem>>, %arg3: memref<1x512xf32, #tpu.memory_space<vmem>>, %arg4: memref<256x256xbf16, #tpu.memory_space<vmem>>, %arg5: memref<1x256xf32, #tpu.memory_space<vmem>>, %arg6: memref<16x256xf32, #tpu.memory_space<vmem>>) attributes {dimension_semantics = [#tpu.dimension_semantics<parallel>], iteration_bounds = array<i64: 1>, scalar_prefetch = 0 : i64, scratch_operands = 0 : i64, tpu.core_type = #tpu.core_type<tc>, window_params = [{transform_indices = @transform_0, window_bounds = array<i64: 16, 256>}, {pipeline_mode = #tpu.pipeline_mode<synchronous>, transform_indices = @transform_1, window_bounds = array<i64: 256, 512>}, {pipeline_mode = #tpu.pipeline_mode<synchronous>, transform_indices = @transform_2, window_bounds = array<i64: 1, 512>}, {pipeline_mode = #tpu.pipeline_mode<synchronous>, transform_indices = @transform_3, window_bounds = array<i64: 256, 256>}, {pipeline_mode = #tpu.pipeline_mode<synchronous>, transform_indices = @transform_4, window_bounds = array<i64: 1, 256>}, {transform_indices = @transform_5, window_bounds = array<i64: 16, 256>}]} {
    %c0 = arith.constant 0 : index
    %c0_0 = arith.constant 0 : index
    %0 = vector.load %arg1[%c0, %c0_0] : memref<16x256xbf16, #tpu.memory_space<vmem>>, vector<16x256xbf16>
    %c0_1 = arith.constant 0 : index
    %c0_2 = arith.constant 0 : index
    %1 = vector.load %arg2[%c0_1, %c0_2] : memref<256x512xbf16, #tpu.memory_space<vmem>>, vector<256x512xbf16>
    %cst = arith.constant dense<0.000000e+00> : vector<16x512xf32>
    %2 = tpu.matmul %0, %1, %cst {dimension_numbers = #tpu.dot_dimension_numbers<[1], [0], [0], [1], [0, 0, 1, 1], [], []>} : vector<16x256xbf16>, vector<256x512xbf16>, vector<16x512xf32> -> vector<16x512xf32>
    %c0_3 = arith.constant 0 : index
    %c0_4 = arith.constant 0 : index
    %3 = vector.load %arg3[%c0_3, %c0_4] : memref<1x512xf32, #tpu.memory_space<vmem>>, vector<1x512xf32>
    %4 = vector.broadcast %3 : vector<1x512xf32> to vector<16x512xf32>
    %5 = arith.addf %2, %4 : vector<16x512xf32>
    %6 = vector.extract_strided_slice %5 {offsets = [0, 0], sizes = [16, 256], strides = [1, 1]} : vector<16x512xf32> to vector<16x256xf32>
    %7 = vector.extract_strided_slice %5 {offsets = [0, 256], sizes = [16, 256], strides = [1, 1]} : vector<16x512xf32> to vector<16x256xf32>
    %cst_5 = arith.constant 0.000000e+00 : f32
    %8 = vector.broadcast %cst_5 : f32 to vector<16x256xf32>
    %9 = arith.subf %8, %6 : vector<16x256xf32>
    %10 = math.exp %9 : vector<16x256xf32>
    %cst_6 = arith.constant 1.000000e+00 : f32
    %11 = vector.broadcast %cst_6 : f32 to vector<16x256xf32>
    %12 = arith.addf %11, %10 : vector<16x256xf32>
    %13 = tpu.reciprocal %12 {approx = true} : vector<16x256xf32> -> vector<16x256xf32>
    %14 = arith.mulf %6, %13 : vector<16x256xf32>
    %15 = arith.mulf %14, %7 : vector<16x256xf32>
    %16 = arith.truncf %15 : vector<16x256xf32> to vector<16x256xbf16>
    %c0_7 = arith.constant 0 : index
    %c0_8 = arith.constant 0 : index
    %17 = vector.load %arg4[%c0_7, %c0_8] : memref<256x256xbf16, #tpu.memory_space<vmem>>, vector<256x256xbf16>
    %cst_9 = arith.constant dense<0.000000e+00> : vector<16x256xf32>
    %18 = tpu.matmul %16, %17, %cst_9 {dimension_numbers = #tpu.dot_dimension_numbers<[1], [0], [0], [1], [0, 0, 1, 1], [], []>} : vector<16x256xbf16>, vector<256x256xbf16>, vector<16x256xf32> -> vector<16x256xf32>
    %c0_10 = arith.constant 0 : index
    %c0_11 = arith.constant 0 : index
    %19 = vector.load %arg5[%c0_10, %c0_11] : memref<1x256xf32, #tpu.memory_space<vmem>>, vector<1x256xf32>
    %20 = vector.broadcast %19 : vector<1x256xf32> to vector<16x256xf32>
    %21 = arith.addf %18, %20 : vector<16x256xf32>
    %c0_12 = arith.constant 0 : index
    %c0_13 = arith.constant 0 : index
    %22 = vector.load %arg6[%c0_12, %c0_13] : memref<16x256xf32, #tpu.memory_space<vmem>>, vector<16x256xf32>
    tpu.vector_store %arg6[%c0_12, %c0_13], %21 {strides = array<i32>} : memref<16x256xf32, #tpu.memory_space<vmem>>, vector<16x256xf32>,
    return
  }
  func.func @transform_0(%arg0: i32) -> (i32, i32) {
    %c0_i32 = arith.constant 0 : i32
    %c0_i32_0 = arith.constant 0 : i32
    return %arg0, %c0_i32 : i32, i32
  }
  func.func @transform_1(%arg0: i32) -> (i32, i32) {
    %c0_i32 = arith.constant 0 : i32
    %c0_i32_0 = arith.constant 0 : i32
    %c0_i32_1 = arith.constant 0 : i32
    return %c0_i32, %c0_i32_0 : i32, i32
  }
  func.func @transform_2(%arg0: i32) -> (i32, i32) {
    %c0_i32 = arith.constant 0 : i32
    %c0_i32_0 = arith.constant 0 : i32
    %c0_i32_1 = arith.constant 0 : i32
    return %c0_i32, %c0_i32_0 : i32, i32
  }
  func.func @transform_3(%arg0: i32) -> (i32, i32) {
    %c0_i32 = arith.constant 0 : i32
    %c0_i32_0 = arith.constant 0 : i32
    %c0_i32_1 = arith.constant 0 : i32
    return %c0_i32, %c0_i32_0 : i32, i32
  }
  func.func @transform_4(%arg0: i32) -> (i32, i32) {
    %c0_i32 = arith.constant 0 : i32
    %c0_i32_0 = arith.constant 0 : i32
    %c0_i32_1 = arith.constant 0 : i32
    return %c0_i32, %c0_i32_0 : i32, i32
  }
  func.func @transform_5(%arg0: i32) -> (i32, i32) {
    %c0_i32 = arith.constant 0 : i32
    %c0_i32_0 = arith.constant 0 : i32
    return %arg0, %c0_i32 : i32, i32
  }
}

</mosaic_0001>

<llo_original>
// kernel: tpu_custom_call.1
$region0: #{tpu_custom_call.1}
  #allocation0 [shape = 'u32[]', space=smem, size = 0x4, offset = 0x4, fixed_abs, tag = 'smem constant byte address 0x4 - core index']
  #allocation1 [shape = 'u32[144,128]{1,0:T(1,128)}', space=vmem, size = 0x12000, scoped, tag = 'internal scratch']
  %s0 = inlined_call_operand.hbm [shape: bf16[16,256], index: 0, kind: input, shape index: {}]
  %s1 = inlined_call_operand.hbm [shape: bf16[256,512], index: 1, kind: input, shape index: {}]
  %s2 = inlined_call_operand.vmem [shape: f32[1,512], index: 2, kind: input, shape index: {}]
  %s3 = inlined_call_operand.hbm [shape: bf16[256,256], index: 3, kind: input, shape index: {}]
  %s4 = inlined_call_operand.vmem [shape: f32[1,256], index: 4, kind: input, shape index: {}]
  %s5 = inlined_call_operand.hbm [shape: f32[16,256], index: 5, kind: output, shape index: {}]
  %s6 = sld [smem:[#allocation0]]
  $region42: #{tpu_custom_call.1} parent=0
    _
  %s8 = ssub.s32 1, %s6
  %s9 = scalar_select 0, %s8, %s6
  $region1: #{tpu_custom_call.1} parent=0
    #allocation2 [shape = 'u8[8192]{0}', space=vmem, size = 0x2000, scoped, tag = 'input window, operand 0, single buffered']
    #allocation3 [shape = 's32[1]{0}', space=sflag, size = 0x4, scoped, tag = 'scoped memory for tpu_custom_call.1']
    #allocation4 [shape = 's32[1]{0}', space=sflag, size = 0x4, scoped, tag = 'scoped memory for tpu_custom_call.1']
    #allocation5 [shape = 'u8[262144]{0}', space=vmem, size = 0x40000, scoped, tag = 'input window, operand 1, single buffered']
    #allocation6 [shape = 's32[1]{0}', space=sflag, size = 0x4, scoped, tag = 'scoped memory for tpu_custom_call.1']
    #allocation7 [shape = 'u8[131072]{0}', space=vmem, size = 0x20000, scoped, tag = 'input window, operand 3, single buffered']
    #allocation8 [shape = 'u8[16384]{0}', space=vmem, size = 0x4000, scoped, tag = 'output window, operand 0, single buffered']
    %10 = vsyncpa [#allocation3], 0
    %11 = vsyncpa [#allocation6], 0
    %12 = vsyncpa [#allocation4], 0
    // Predicated region
    $region2: #{tpu_custom_call.1} parent=1 // pred_check
      _
    $region3: #{tpu_custom_call.1} parent=1 // pred_check_branch
      %14 = sbr.rel (0) target = $region5
    $region4: #{tpu_custom_call.1} parent=1 // pred_region
      %s16 = ssub.s32 256, 256
      %17 = vsyncadd [#allocation3], %s16
      %s18 = sshll.u32 [#allocation2], 4
      %s19 = int_to_ptr.vmem [resolvable:$true] %s18
      %24 = dma.hbm_to_vmem [thread:$0]  %s0, 256, %s19, [#allocation3], 128, 128, 8
    $region5: #{tpu_custom_call.1} parent=1 // pred_fallthru
      _
    // Predicated region
    $region6: #{tpu_custom_call.1} parent=1 // pred_check
      _
    $region7: #{tpu_custom_call.1} parent=1 // pred_check_branch
      %26 = sbr.rel (0) target = $region9
    $region8: #{tpu_custom_call.1} parent=1 // pred_region
      %s28 = ssub.s32 8192, 8192
      %29 = vsyncadd [#allocation6], %s28
      %s30 = sshll.u32 [#allocation5], 4
      %s31 = int_to_ptr.vmem [resolvable:$true] %s30
      %36 = dma.hbm_to_vmem [thread:$0]  %s1, 8192, %s31, [#allocation6], 256, 256, 16
    $region9: #{tpu_custom_call.1} parent=1 // pred_fallthru
      _
    // Predicated region
    $region10: #{tpu_custom_call.1} parent=1 // pred_check
      _
    $region11: #{tpu_custom_call.1} parent=1 // pred_check_branch
      %38 = sbr.rel (0) target = $region13
    $region12: #{tpu_custom_call.1} parent=1 // pred_region
      _
    $region13: #{tpu_custom_call.1} parent=1 // pred_fallthru
      _
    // Predicated region
    $region14: #{tpu_custom_call.1} parent=1 // pred_check
      _
    $region15: #{tpu_custom_call.1} parent=1 // pred_check_branch
      %40 = sbr.rel (0) target = $region17
    $region16: #{tpu_custom_call.1} parent=1 // pred_region
      %s42 = ssub.s32 4096, 4096
      %43 = vsyncadd [#allocation6], %s42
      %s44 = sshll.u32 [#allocation7], 4
      %s45 = int_to_ptr.vmem [resolvable:$true] %s44
      %50 = dma.hbm_to_vmem [thread:$0]  %s3, 4096, %s45, [#allocation6], 128, 128, 8
    $region17: #{tpu_custom_call.1} parent=1 // pred_fallthru
      _
    // Predicated region
    $region18: #{tpu_custom_call.1} parent=1 // pred_check
      _
    $region19: #{tpu_custom_call.1} parent=1 // pred_check_branch
      %52 = sbr.rel (0) target = $region21
    $region20: #{tpu_custom_call.1} parent=1 // pred_region
      _
    $region21: #{tpu_custom_call.1} parent=1 // pred_fallthru
      _
    // Predicated region
    $region22: #{tpu_custom_call.1} parent=1 // pred_check
      _
    $region23: #{tpu_custom_call.1} parent=1 // pred_check_branch
      %54 = sbr.rel (0) target = $region25
    $region24: #{tpu_custom_call.1} parent=1 // pred_region
      %55 = dma.done [#allocation3], 256
    $region25: #{tpu_custom_call.1} parent=1 // pred_fallthru
      _
    // Predicated region
    $region26: #{tpu_custom_call.1} parent=1 // pred_check
      _
    $region27: #{tpu_custom_call.1} parent=1 // pred_check_branch
      %57 = sbr.rel (0) target = $region29
    $region28: #{tpu_custom_call.1} parent=1 // pred_region
      %58 = dma.done [#allocation6], 8192
    $region29: #{tpu_custom_call.1} parent=1 // pred_fallthru
      _
    // Predicated region
    $region30: #{tpu_custom_call.1} parent=1 // pred_check
      _
    $region31: #{tpu_custom_call.1} parent=1 // pred_check_branch
      %60 = sbr.rel (0) target = $region33
    $region32: #{tpu_custom_call.1} parent=1 // pred_region
      %61 = dma.done [#allocation6], 4096
    $region33: #{tpu_custom_call.1} parent=1 // pred_fallthru
      _
    %v62 = vld [vmem:[#allocation2] sm:$0xff]
    %v63 = vld [vmem:[#allocation2 + $0x8] sm:$0xff]
    %v64 = vld [vmem:[#allocation5] sm:$0xff]
    %v65 = vld [vmem:[#allocation5 + $0x8] sm:$0xff]
    %v66 = vld [vmem:[#allocation5 + $0x10] sm:$0xff]
    %v67 = vld [vmem:[#allocation5 + $0x18] sm:$0xff]
    %v68 = vld [vmem:[#allocation5 + $0x20] sm:$0xff]
    %v69 = vld [vmem:[#allocation5 + $0x28] sm:$0xff]
    %v70 = vld [vmem:[#allocation5 + $0x30] sm:$0xff]
    %v71 = vld [vmem:[#allocation5 + $0x38] sm:$0xff]
    %v72 = vld [vmem:[#allocation5 + $0x40] sm:$0xff]
    %v73 = vld [vmem:[#allocation5 + $0x48] sm:$0xff]
    %v74 = vld [vmem:[#allocation5 + $0x50] sm:$0xff]
    %v75 = vld [vmem:[#allocation5 + $0x58] sm:$0xff]
    %v76 = vld [vmem:[#allocation5 + $0x60] sm:$0xff]
    %v77 = vld [vmem:[#allocation5 + $0x68] sm:$0xff]
    %v78 = vld [vmem:[#allocation5 + $0x70] sm:$0xff]
    %v79 = vld [vmem:[#allocation5 + $0x78] sm:$0xff]
    %v80 = vld [vmem:[#allocation5 + $0x80] sm:$0xff]
    %v81 = vld [vmem:[#allocation5 + $0x88] sm:$0xff]
    %v82 = vld [vmem:[#allocation5 + $0x90] sm:$0xff]
    %v83 = vld [vmem:[#allocation5 + $0x98] sm:$0xff]
    %v84 = vld [vmem:[#allocation5 + $0xa0] sm:$0xff]
    %v85 = vld [vmem:[#allocation5 + $0xa8] sm:$0xff]
    %v86 = vld [vmem:[#allocation5 + $0xb0] sm:$0xff]
    %v87 = vld [vmem:[#allocation5 + $0xb8] sm:$0xff]
    %v88 = vld [vmem:[#allocation5 + $0xc0] sm:$0xff]
    %v89 = vld [vmem:[#allocation5 + $0xc8] sm:$0xff]
    %v90 = vld [vmem:[#allocation5 + $0xd0] sm:$0xff]
    %v91 = vld [vmem:[#allocation5 + $0xd8] sm:$0xff]
    %v92 = vld [vmem:[#allocation5 + $0xe0] sm:$0xff]
    %v93 = vld [vmem:[#allocation5 + $0xe8] sm:$0xff]
    %v94 = vld [vmem:[#allocation5 + $0xf0] sm:$0xff]
    %v95 = vld [vmem:[#allocation5 + $0xf8] sm:$0xff]
    %v96 = vld [vmem:[#allocation5 + $0x100] sm:$0xff]
    %v97 = vld [vmem:[#allocation5 + $0x108] sm:$0xff]
    %v98 = vld [vmem:[#allocation5 + $0x110] sm:$0xff]
    %v99 = vld [vmem:[#allocation5 + $0x118] sm:$0xff]
    %v100 = vld [vmem:[#allocation5 + $0x120] sm:$0xff]
    %v101 = vld [vmem:[#allocation5 + $0x128] sm:$0xff]
    %v102 = vld [vmem:[#allocation5 + $0x130] sm:$0xff]
    %v103 = vld [vmem:[#allocation5 + $0x138] sm:$0xff]
    %v104 = vld [vmem:[#allocation5 + $0x140] sm:$0xff]
    %v105 = vld [vmem:[#allocation5 + $0x148] sm:$0xff]
    %v106 = vld [vmem:[#allocation5 + $0x150] sm:$0xff]
    %v107 = vld [vmem:[#allocation5 + $0x158] sm:$0xff]
    %v108 = vld [vmem:[#allocation5 + $0x160] sm:$0xff]
    %v109 = vld [vmem:[#allocation5 + $0x168] sm:$0xff]
    %v110 = vld [vmem:[#allocation5 + $0x170] sm:$0xff]
    %v111 = vld [vmem:[#allocation5 + $0x178] sm:$0xff]
    %v112 = vld [vmem:[#allocation5 + $0x180] sm:$0xff]
    %v113 = vld [vmem:[#allocation5 + $0x188] sm:$0xff]
    %v114 = vld [vmem:[#allocation5 + $0x190] sm:$0xff]
    %v115 = vld [vmem:[#allocation5 + $0x198] sm:$0xff]
    %v116 = vld [vmem:[#allocation5 + $0x1a0] sm:$0xff]
    %v117 = vld [vmem:[#allocation5 + $0x1a8] sm:$0xff]
    %v118 = vld [vmem:[#allocation5 + $0x1b0] sm:$0xff]
    %v119 = vld [vmem:[#allocation5 + $0x1b8] sm:$0xff]
    %v120 = vld [vmem:[#allocation5 + $0x1c0] sm:$0xff]
    %v121 = vld [vmem:[#allocation5 + $0x1c8] sm:$0xff]
    %v122 = vld [vmem:[#allocation5 + $0x1d0] sm:$0xff]
    %v123 = vld [vmem:[#allocation5 + $0x1d8] sm:$0xff]
    %v124 = vld [vmem:[#allocation5 + $0x1e0] sm:$0xff]
    %v125 = vld [vmem:[#allocation5 + $0x1e8] sm:$0xff]
    %v126 = vld [vmem:[#allocation5 + $0x1f0] sm:$0xff]
    %v127 = vld [vmem:[#allocation5 + $0x1f8] sm:$0xff]
    %v128 = vld [vmem:[%s2] sm:$0xf]
    %v130 = vlaneseq
    %v131 = vshrl.u32 %v130, 7
    %v132 = vsub.s32 0, %v131
    %v133 = vrot.slane %v128, %v132
    %v134 = vlaneseq
    %v135 = vshrl.u32 %v134, 7
    %v136 = vsub.s32 1, %v135
    %v137 = vrot.slane %v128, %v136
    %v138 = vlaneseq
    %v139 = vshrl.u32 %v138, 7
    %v140 = vsub.s32 2, %v139
    %v141 = vrot.slane %v128, %v140
    %v142 = vlaneseq
    %v143 = vshrl.u32 %v142, 7
    %v144 = vsub.s32 3, %v143
    %v145 = vrot.slane %v128, %v144
    %v152 = vunpack.c.l.b16 %v62
    %v153 = vunpack.c.h.b16 %v62
    %v154 = vunpack.c.l.b16 %v63
    %v155 = vunpack.c.h.b16 %v63
    %v156 = vpack.c.b16 %v154, %v152
    %v157 = vpack.c.b16 %v155, %v153
    %v224 = vunpack.c.l.b16 %v64
    %v225 = vunpack.c.h.b16 %v64
    %v226 = vunpack.c.l.b16 %v65
    %v227 = vunpack.c.h.b16 %v65
    %v228 = vunpack.c.l.b16 %v66
    %v229 = vunpack.c.h.b16 %v66
    %v230 = vunpack.c.l.b16 %v67
    %v231 = vunpack.c.h.b16 %v67
    %v232 = vunpack.c.l.b16 %v68
    %v233 = vunpack.c.h.b16 %v68
    %v234 = vunpack.c.l.b16 %v69
    %v235 = vunpack.c.h.b16 %v69
    %v236 = vunpack.c.l.b16 %v70
    %v237 = vunpack.c.h.b16 %v70
    %v238 = vunpack.c.l.b16 %v71
    %v239 = vunpack.c.h.b16 %v71
    %v240 = vunpack.c.l.b16 %v72
    %v241 = vunpack.c.h.b16 %v72
    %v242 = vunpack.c.l.b16 %v73
    %v243 = vunpack.c.h.b16 %v73
    %v244 = vunpack.c.l.b16 %v74
    %v245 = vunpack.c.h.b16 %v74
    %v246 = vunpack.c.l.b16 %v75
    %v247 = vunpack.c.h.b16 %v75
    %v248 = vunpack.c.l.b16 %v76
    %v249 = vunpack.c.h.b16 %v76
    %v250 = vunpack.c.l.b16 %v77
    %v251 = vunpack.c.h.b16 %v77
    %v252 = vunpack.c.l.b16 %v78
    %v253 = vunpack.c.h.b16 %v78
    %v254 = vunpack.c.l.b16 %v79
    %v255 = vunpack.c.h.b16 %v79
    %v256 = vunpack.c.l.b16 %v80
    %v257 = vunpack.c.h.b16 %v80
    %v258 = vunpack.c.l.b16 %v81
    %v259 = vunpack.c.h.b16 %v81
    %v260 = vunpack.c.l.b16 %v82
    %v261 = vunpack.c.h.b16 %v82
    %v262 = vunpack.c.l.b16 %v83
    %v263 = vunpack.c.h.b16 %v83
    %v264 = vunpack.c.l.b16 %v84
    %v265 = vunpack.c.h.b16 %v84
    %v266 = vunpack.c.l.b16 %v85
    %v267 = vunpack.c.h.b16 %v85
    %v268 = vunpack.c.l.b16 %v86
    %v269 = vunpack.c.h.b16 %v86
    %v270 = vunpack.c.l.b16 %v87
    %v271 = vunpack.c.h.b16 %v87
    %v272 = vunpack.c.l.b16 %v88
    %v273 = vunpack.c.h.b16 %v88
    %v274 = vunpack.c.l.b16 %v89
    %v275 = vunpack.c.h.b16 %v89
    %v276 = vunpack.c.l.b16 %v90
    %v277 = vunpack.c.h.b16 %v90
    %v278 = vunpack.c.l.b16 %v91
    %v279 = vunpack.c.h.b16 %v91
    %v280 = vunpack.c.l.b16 %v92
    %v281 = vunpack.c.h.b16 %v92
    %v282 = vunpack.c.l.b16 %v93
    %v283 = vunpack.c.h.b16 %v93
    %v284 = vunpack.c.l.b16 %v94
    %v285 = vunpack.c.h.b16 %v94
    %v286 = vunpack.c.l.b16 %v95
    %v287 = vunpack.c.h.b16 %v95
    %v288 = vunpack.c.l.b16 %v96
    %v289 = vunpack.c.h.b16 %v96
    %v290 = vunpack.c.l.b16 %v97
    %v291 = vunpack.c.h.b16 %v97
    %v292 = vunpack.c.l.b16 %v98
    %v293 = vunpack.c.h.b16 %v98
    %v294 = vunpack.c.l.b16 %v99
    %v295 = vunpack.c.h.b16 %v99
    %v296 = vunpack.c.l.b16 %v100
    %v297 = vunpack.c.h.b16 %v100
    %v298 = vunpack.c.l.b16 %v101
    %v299 = vunpack.c.h.b16 %v101
    %v300 = vunpack.c.l.b16 %v102
    %v301 = vunpack.c.h.b16 %v102
    %v302 = vunpack.c.l.b16 %v103
    %v303 = vunpack.c.h.b16 %v103
    %v304 = vunpack.c.l.b16 %v104
    %v305 = vunpack.c.h.b16 %v104
    %v306 = vunpack.c.l.b16 %v105
    %v307 = vunpack.c.h.b16 %v105
    %v308 = vunpack.c.l.b16 %v106
    %v309 = vunpack.c.h.b16 %v106
    %v310 = vunpack.c.l.b16 %v107
    %v311 = vunpack.c.h.b16 %v107
    %v312 = vunpack.c.l.b16 %v108
    %v313 = vunpack.c.h.b16 %v108
    %v314 = vunpack.c.l.b16 %v109
    %v315 = vunpack.c.h.b16 %v109
    %v316 = vunpack.c.l.b16 %v110
    %v317 = vunpack.c.h.b16 %v110
    %v318 = vunpack.c.l.b16 %v111
    %v319 = vunpack.c.h.b16 %v111
    %v320 = vunpack.c.l.b16 %v112
    %v321 = vunpack.c.h.b16 %v112
    %v322 = vunpack.c.l.b16 %v113
    %v323 = vunpack.c.h.b16 %v113
    %v324 = vunpack.c.l.b16 %v114
    %v325 = vunpack.c.h.b16 %v114
    %v326 = vunpack.c.l.b16 %v115
    %v327 = vunpack.c.h.b16 %v115
    %v328 = vunpack.c.l.b16 %v116
    %v329 = vunpack.c.h.b16 %v116
    %v330 = vunpack.c.l.b16 %v117
    %v331 = vunpack.c.h.b16 %v117
    %v332 = vunpack.c.l.b16 %v118
    %v333 = vunpack.c.h.b16 %v118
    %v334 = vunpack.c.l.b16 %v119
    %v335 = vunpack.c.h.b16 %v119
    %v336 = vunpack.c.l.b16 %v120
    %v337 = vunpack.c.h.b16 %v120
    %v338 = vunpack.c.l.b16 %v121
    %v339 = vunpack.c.h.b16 %v121
    %v340 = vunpack.c.l.b16 %v122
    %v341 = vunpack.c.h.b16 %v122
    %v342 = vunpack.c.l.b16 %v123
    %v343 = vunpack.c.h.b16 %v123
    %v344 = vunpack.c.l.b16 %v124
    %v345 = vunpack.c.h.b16 %v124
    %v346 = vunpack.c.l.b16 %v125
    %v347 = vunpack.c.h.b16 %v125
    %v348 = vunpack.c.l.b16 %v126
    %v349 = vunpack.c.h.b16 %v126
    %v350 = vunpack.c.l.b16 %v127
    %v351 = vunpack.c.h.b16 %v127
    %v352 = vpack.c.b16 %v228, %v224
    %v353 = vpack.c.b16 %v229, %v225
    %v354 = vpack.c.b16 %v230, %v226
    %v355 = vpack.c.b16 %v231, %v227
    %v356 = vpack.c.b16 %v236, %v232
    %v357 = vpack.c.b16 %v237, %v233
    %v358 = vpack.c.b16 %v238, %v234
    %v359 = vpack.c.b16 %v239, %v235
    %v360 = vpack.c.b16 %v244, %v240
    %v361 = vpack.c.b16 %v245, %v241
    %v362 = vpack.c.b16 %v246, %v242
    %v363 = vpack.c.b16 %v247, %v243
    %v364 = vpack.c.b16 %v252, %v248
    %v365 = vpack.c.b16 %v253, %v249
    %v366 = vpack.c.b16 %v254, %v250
    %v367 = vpack.c.b16 %v255, %v251
    %v368 = vpack.c.b16 %v260, %v256
    %v369 = vpack.c.b16 %v261, %v257
    %v370 = vpack.c.b16 %v262, %v258
    %v371 = vpack.c.b16 %v263, %v259
    %v372 = vpack.c.b16 %v268, %v264
    %v373 = vpack.c.b16 %v269, %v265
    %v374 = vpack.c.b16 %v270, %v266
    %v375 = vpack.c.b16 %v271, %v267
    %v376 = vpack.c.b16 %v276, %v272
    %v377 = vpack.c.b16 %v277, %v273
    %v378 = vpack.c.b16 %v278, %v274
    %v379 = vpack.c.b16 %v279, %v275
    %v380 = vpack.c.b16 %v284, %v280
    %v381 = vpack.c.b16 %v285, %v281
    %v382 = vpack.c.b16 %v286, %v282
    %v383 = vpack.c.b16 %v287, %v283
    %v384 = vpack.c.b16 %v292, %v288
    %v385 = vpack.c.b16 %v293, %v289
    %v386 = vpack.c.b16 %v294, %v290
    %v387 = vpack.c.b16 %v295, %v291
    %v388 = vpack.c.b16 %v300, %v296
    %v389 = vpack.c.b16 %v301, %v297
    %v390 = vpack.c.b16 %v302, %v298
    %v391 = vpack.c.b16 %v303, %v299
    %v392 = vpack.c.b16 %v308, %v304
    %v393 = vpack.c.b16 %v309, %v305
    %v394 = vpack.c.b16 %v310, %v306
    %v395 = vpack.c.b16 %v311, %v307
    %v396 = vpack.c.b16 %v316, %v312
    %v397 = vpack.c.b16 %v317, %v313
    %v398 = vpack.c.b16 %v318, %v314
    %v399 = vpack.c.b16 %v319, %v315
    %v400 = vpack.c.b16 %v324, %v320
    %v401 = vpack.c.b16 %v325, %v321
    %v402 = vpack.c.b16 %v326, %v322
    %v403 = vpack.c.b16 %v327, %v323
    %v404 = vpack.c.b16 %v332, %v328
    %v405 = vpack.c.b16 %v333, %v329
    %v406 = vpack.c.b16 %v334, %v330
    %v407 = vpack.c.b16 %v335, %v331
    %v408 = vpack.c.b16 %v340, %v336
    %v409 = vpack.c.b16 %v341, %v337
    %v410 = vpack.c.b16 %v342, %v338
    %v411 = vpack.c.b16 %v343, %v339
    %v412 = vpack.c.b16 %v348, %v344
    %v413 = vpack.c.b16 %v349, %v345
    %v414 = vpack.c.b16 %v350, %v346
    %v415 = vpack.c.b16 %v351, %v347
    %480 = vmatprep.subr.bf16.mxu0 %v353
    %481 = vmatpush1.bf16.msra.mxu0 %v352
    %482 = vmatprep.subr.bf16.mxu0 %v357
    %483 = vmatpush1.bf16.msra.mxu0 %v356
    %484 = vmatprep.subr.bf16.mxu0 %v361
    %485 = vmatpush1.bf16.msra.mxu0 %v360
    %486 = vmatprep.subr.bf16.mxu0 %v365
    %487 = vmatpush1.bf16.msra.mxu0 %v364
    %488 = vmatprep.subr.bf16.mxu0 %v369
    %489 = vmatpush1.bf16.msra.mxu0 %v368
    %490 = vmatprep.subr.bf16.mxu0 %v373
    %491 = vmatpush1.bf16.msra.mxu0 %v372
    %492 = vmatprep.subr.bf16.mxu0 %v377
    %493 = vmatpush1.bf16.msra.mxu0 %v376
    %494 = vmatprep.subr.bf16.mxu0 %v381
    %495 = vmatpush1.bf16.msra.mxu0 %v380
    %496 = vmatprep.subr.bf16.mxu0 %v385
    %497 = vmatpush1.bf16.msra.mxu0 %v384
    %498 = vmatprep.subr.bf16.mxu0 %v389
    %499 = vmatpush1.bf16.msra.mxu0 %v388
    %500 = vmatprep.subr.bf16.mxu0 %v393
    %501 = vmatpush1.bf16.msra.mxu0 %v392
    %502 = vmatprep.subr.bf16.mxu0 %v397
    %503 = vmatpush1.bf16.msra.mxu0 %v396
    %504 = vmatprep.subr.bf16.mxu0 %v401
    %505 = vmatpush1.bf16.msra.mxu0 %v400
    %506 = vmatprep.subr.bf16.mxu0 %v405
    %507 = vmatpush1.bf16.msra.mxu0 %v404
    %508 = vmatprep.subr.bf16.mxu0 %v409
    %509 = vmatpush1.bf16.msra.mxu0 %v408
    %510 = vmatprep.subr.bf16.mxu0 %v413
    %511 = vmatpush1.bf16.msra.mxu0 %v412
    %512 = vmatprep.mubr.bf16.mxu0 %v157
    %513 = vmatmul.mubr.bf16.gmra.mrb[0].mxu0 %v156
    %v514 = vpop.f32.mrb[0].mxu0
    %v515 = vadd.f32 %v133, %v514
    %v516 = vpop.f32.mrb[0].mxu0
    %v517 = vadd.f32 %v137, %v516
    %v518 = vpop.f32.mrb[0].mxu0
    %v519 = vadd.f32 %v133, %v518
    %v520 = vpop.f32.mrb[0].mxu0
    %v521 = vadd.f32 %v137, %v520
    %522 = vdwg.mxu0
    %523 = vmatprep.subr.bf16.mxu0 %v355
    %524 = vmatpush1.bf16.msra.mxu0 %v354
    %525 = vmatprep.subr.bf16.mxu0 %v359
    %526 = vmatpush1.bf16.msra.mxu0 %v358
    %527 = vmatprep.subr.bf16.mxu0 %v363
    %528 = vmatpush1.bf16.msra.mxu0 %v362
    %529 = vmatprep.subr.bf16.mxu0 %v367
    %530 = vmatpush1.bf16.msra.mxu0 %v366
    %531 = vmatprep.subr.bf16.mxu0 %v371
    %532 = vmatpush1.bf16.msra.mxu0 %v370
    %533 = vmatprep.subr.bf16.mxu0 %v375
    %534 = vmatpush1.bf16.msra.mxu0 %v374
    %535 = vmatprep.subr.bf16.mxu0 %v379
    %536 = vmatpush1.bf16.msra.mxu0 %v378
    %537 = vmatprep.subr.bf16.mxu0 %v383
    %538 = vmatpush1.bf16.msra.mxu0 %v382
    %539 = vmatprep.subr.bf16.mxu0 %v387
    %540 = vmatpush1.bf16.msra.mxu0 %v386
    %541 = vmatprep.subr.bf16.mxu0 %v391
    %542 = vmatpush1.bf16.msra.mxu0 %v390
    %543 = vmatprep.subr.bf16.mxu0 %v395
    %544 = vmatpush1.bf16.msra.mxu0 %v394
    %545 = vmatprep.subr.bf16.mxu0 %v399
    %546 = vmatpush1.bf16.msra.mxu0 %v398
    %547 = vmatprep.subr.bf16.mxu0 %v403
    %548 = vmatpush1.bf16.msra.mxu0 %v402
    %549 = vmatprep.subr.bf16.mxu0 %v407
    %550 = vmatpush1.bf16.msra.mxu0 %v406
    %551 = vmatprep.subr.bf16.mxu0 %v411
    %552 = vmatpush1.bf16.msra.mxu0 %v410
    %553 = vmatprep.subr.bf16.mxu0 %v415
    %554 = vmatpush1.bf16.msra.mxu0 %v414
    %555 = vmatprep.mubr.bf16.mxu0 %v157
    %556 = vmatmul.mubr.bf16.gmra.mrb[0].mxu0 %v156
    %v557 = vpop.f32.mrb[0].mxu0
    %v558 = vadd.f32 %v141, %v557
    %v559 = vpop.f32.mrb[0].mxu0
    %v560 = vadd.f32 %v145, %v559
    %v561 = vpop.f32.mrb[0].mxu0
    %v562 = vadd.f32 %v141, %v561
    %v563 = vpop.f32.mrb[0].mxu0
    %v564 = vadd.f32 %v145, %v563
    %565 = vdwg.mxu0
    %v566 = vsub.f32 0.0, %v515
    %v567 = vsub.f32 0.0, %v517
    %v568 = vsub.f32 0.0, %v519
    %v569 = vsub.f32 0.0, %v521
    %v570 = vmul.f32 %v566, 1.442695
    %v571 = vpow.pop %v570
    %v572 = vmul.f32 %v567, 1.442695
    %v573 = vpow.pop %v572
    %v574 = vmul.f32 %v568, 1.442695
    %v575 = vpow.pop %v574
    %v576 = vmul.f32 %v569, 1.442695
    %v577 = vpow.pop %v576
    %v578 = vadd.f32 %v571, 1.0
    %v579 = vadd.f32 %v573, 1.0
    %v580 = vadd.f32 %v575, 1.0
    %v581 = vadd.f32 %v577, 1.0
    %v582 = vrcp.pop %v578
    %v583 = vrcp.pop %v579
    %v584 = vrcp.pop %v580
    %v585 = vrcp.pop %v581
    %v586 = vmul.f32 %v515, %v582
    %v587 = vmul.f32 %v517, %v583
    %v588 = vmul.f32 %v519, %v584
    %v589 = vmul.f32 %v521, %v585
    %v590 = vmul.f32 %v586, %v558
    %v591 = vmul.f32 %v587, %v560
    %v592 = vmul.f32 %v588, %v562
    %v593 = vmul.f32 %v589, %v564
    %v594 = vpack.c.bf16 %v592, %v590
    %v595 = vpack.c.bf16 %v593, %v591
    %v596 = vld [vmem:[#allocation7] sm:$0xff]
    %v597 = vld [vmem:[#allocation7 + $0x8] sm:$0xff]
    %v598 = vld [vmem:[#allocation7 + $0x10] sm:$0xff]
    %v599 = vld [vmem:[#allocation7 + $0x18] sm:$0xff]
    %v600 = vld [vmem:[#allocation7 + $0x20] sm:$0xff]
    %v601 = vld [vmem:[#allocation7 + $0x28] sm:$0xff]
    %v602 = vld [vmem:[#allocation7 + $0x30] sm:$0xff]
    %v603 = vld [vmem:[#allocation7 + $0x38] sm:$0xff]
    %v604 = vld [vmem:[#allocation7 + $0x40] sm:$0xff]
    %v605 = vld [vmem:[#allocation7 + $0x48] sm:$0xff]
    %v606 = vld [vmem:[#allocation7 + $0x50] sm:$0xff]
    %v607 = vld [vmem:[#allocation7 + $0x58] sm:$0xff]
    %v608 = vld [vmem:[#allocation7 + $0x60] sm:$0xff]
    %v609 = vld [vmem:[#allocation7 + $0x68] sm:$0xff]
    %v610 = vld [vmem:[#allocation7 + $0x70] sm:$0xff]
    %v611 = vld [vmem:[#allocation7 + $0x78] sm:$0xff]
    %v612 = vld [vmem:[#allocation7 + $0x80] sm:$0xff]
    %v613 = vld [vmem:[#allocation7 + $0x88] sm:$0xff]
    %v614 = vld [vmem:[#allocation7 + $0x90] sm:$0xff]
    %v615 = vld [vmem:[#allocation7 + $0x98] sm:$0xff]
    %v616 = vld [vmem:[#allocation7 + $0xa0] sm:$0xff]
    %v617 = vld [vmem:[#allocation7 + $0xa8] sm:$0xff]
    %v618 = vld [vmem:[#allocation7 + $0xb0] sm:$0xff]
    %v619 = vld [vmem:[#allocation7 + $0xb8] sm:$0xff]
    %v620 = vld [vmem:[#allocation7 + $0xc0] sm:$0xff]
    %v621 = vld [vmem:[#allocation7 + $0xc8] sm:$0xff]
    %v622 = vld [vmem:[#allocation7 + $0xd0] sm:$0xff]
    %v623 = vld [vmem:[#allocation7 + $0xd8] sm:$0xff]
    %v624 = vld [vmem:[#allocation7 + $0xe0] sm:$0xff]
    %v625 = vld [vmem:[#allocation7 + $0xe8] sm:$0xff]
    %v626 = vld [vmem:[#allocation7 + $0xf0] sm:$0xff]
    %v627 = vld [vmem:[#allocation7 + $0xf8] sm:$0xff]
    %v628 = vld [vmem:[%s4] sm:$0x3]
    %v630 = vlaneseq
    %v631 = vshrl.u32 %v630, 7
    %v632 = vsub.s32 0, %v631
    %v633 = vrot.slane %v628, %v632
    %v634 = vlaneseq
    %v635 = vshrl.u32 %v634, 7
    %v636 = vsub.s32 1, %v635
    %v637 = vrot.slane %v628, %v636
    %v672 = vunpack.c.l.b16 %v596
    %v673 = vunpack.c.h.b16 %v596
    %v674 = vunpack.c.l.b16 %v597
    %v675 = vunpack.c.h.b16 %v597
    %v676 = vunpack.c.l.b16 %v598
    %v677 = vunpack.c.h.b16 %v598
    %v678 = vunpack.c.l.b16 %v599
    %v679 = vunpack.c.h.b16 %v599
    %v680 = vunpack.c.l.b16 %v600
    %v681 = vunpack.c.h.b16 %v600
    %v682 = vunpack.c.l.b16 %v601
    %v683 = vunpack.c.h.b16 %v601
    %v684 = vunpack.c.l.b16 %v602
    %v685 = vunpack.c.h.b16 %v602
    %v686 = vunpack.c.l.b16 %v603
    %v687 = vunpack.c.h.b16 %v603
    %v688 = vunpack.c.l.b16 %v604
    %v689 = vunpack.c.h.b16 %v604
    %v690 = vunpack.c.l.b16 %v605
    %v691 = vunpack.c.h.b16 %v605
    %v692 = vunpack.c.l.b16 %v606
    %v693 = vunpack.c.h.b16 %v606
    %v694 = vunpack.c.l.b16 %v607
    %v695 = vunpack.c.h.b16 %v607
    %v696 = vunpack.c.l.b16 %v608
    %v697 = vunpack.c.h.b16 %v608
    %v698 = vunpack.c.l.b16 %v609
    %v699 = vunpack.c.h.b16 %v609
    %v700 = vunpack.c.l.b16 %v610
    %v701 = vunpack.c.h.b16 %v610
    %v702 = vunpack.c.l.b16 %v611
    %v703 = vunpack.c.h.b16 %v611
    %v704 = vunpack.c.l.b16 %v612
    %v705 = vunpack.c.h.b16 %v612
    %v706 = vunpack.c.l.b16 %v613
    %v707 = vunpack.c.h.b16 %v613
    %v708 = vunpack.c.l.b16 %v614
    %v709 = vunpack.c.h.b16 %v614
    %v710 = vunpack.c.l.b16 %v615
    %v711 = vunpack.c.h.b16 %v615
    %v712 = vunpack.c.l.b16 %v616
    %v713 = vunpack.c.h.b16 %v616
    %v714 = vunpack.c.l.b16 %v617
    %v715 = vunpack.c.h.b16 %v617
    %v716 = vunpack.c.l.b16 %v618
    %v717 = vunpack.c.h.b16 %v618
    %v718 = vunpack.c.l.b16 %v619
    %v719 = vunpack.c.h.b16 %v619
    %v720 = vunpack.c.l.b16 %v620
    %v721 = vunpack.c.h.b16 %v620
    %v722 = vunpack.c.l.b16 %v621
    %v723 = vunpack.c.h.b16 %v621
    %v724 = vunpack.c.l.b16 %v622
    %v725 = vunpack.c.h.b16 %v622
    %v726 = vunpack.c.l.b16 %v623
    %v727 = vunpack.c.h.b16 %v623
    %v728 = vunpack.c.l.b16 %v624
    %v729 = vunpack.c.h.b16 %v624
    %v730 = vunpack.c.l.b16 %v625
    %v731 = vunpack.c.h.b16 %v625
    %v732 = vunpack.c.l.b16 %v626
    %v733 = vunpack.c.h.b16 %v626
    %v734 = vunpack.c.l.b16 %v627
    %v735 = vunpack.c.h.b16 %v627
    %v736 = vpack.c.b16 %v674, %v672
    %v737 = vpack.c.b16 %v675, %v673
    %v738 = vpack.c.b16 %v678, %v676
    %v739 = vpack.c.b16 %v679, %v677
    %v740 = vpack.c.b16 %v682, %v680
    %v741 = vpack.c.b16 %v683, %v681
    %v742 = vpack.c.b16 %v686, %v684
    %v743 = vpack.c.b16 %v687, %v685
    %v744 = vpack.c.b16 %v690, %v688
    %v745 = vpack.c.b16 %v691, %v689
    %v746 = vpack.c.b16 %v694, %v692
    %v747 = vpack.c.b16 %v695, %v693
    %v748 = vpack.c.b16 %v698, %v696
    %v749 = vpack.c.b16 %v699, %v697
    %v750 = vpack.c.b16 %v702, %v700
    %v751 = vpack.c.b16 %v703, %v701
    %v752 = vpack.c.b16 %v706, %v704
    %v753 = vpack.c.b16 %v707, %v705
    %v754 = vpack.c.b16 %v710, %v708
    %v755 = vpack.c.b16 %v711, %v709
    %v756 = vpack.c.b16 %v714, %v712
    %v757 = vpack.c.b16 %v715, %v713
    %v758 = vpack.c.b16 %v718, %v716
    %v759 = vpack.c.b16 %v719, %v717
    %v760 = vpack.c.b16 %v722, %v720
    %v761 = vpack.c.b16 %v723, %v721
    %v762 = vpack.c.b16 %v726, %v724
    %v763 = vpack.c.b16 %v727, %v725
    %v764 = vpack.c.b16 %v730, %v728
    %v765 = vpack.c.b16 %v731, %v729
    %v766 = vpack.c.b16 %v734, %v732
    %v767 = vpack.c.b16 %v735, %v733
    %800 = vmatprep.subr.bf16.mxu0 %v737
    %801 = vmatpush1.bf16.msra.mxu0 %v736
    %802 = vmatprep.subr.bf16.mxu0 %v739
    %803 = vmatpush1.bf16.msra.mxu0 %v738
    %804 = vmatprep.subr.bf16.mxu0 %v741
    %805 = vmatpush1.bf16.msra.mxu0 %v740
    %806 = vmatprep.subr.bf16.mxu0 %v743
    %807 = vmatpush1.bf16.msra.mxu0 %v742
    %808 = vmatprep.subr.bf16.mxu0 %v745
    %809 = vmatpush1.bf16.msra.mxu0 %v744
    %810 = vmatprep.subr.bf16.mxu0 %v747
    %811 = vmatpush1.bf16.msra.mxu0 %v746
    %812 = vmatprep.subr.bf16.mxu0 %v749
    %813 = vmatpush1.bf16.msra.mxu0 %v748
    %814 = vmatprep.subr.bf16.mxu0 %v751
    %815 = vmatpush1.bf16.msra.mxu0 %v750
    %816 = vmatprep.subr.bf16.mxu0 %v753
    %817 = vmatpush1.bf16.msra.mxu0 %v752
    %818 = vmatprep.subr.bf16.mxu0 %v755
    %819 = vmatpush1.bf16.msra.mxu0 %v754
    %820 = vmatprep.subr.bf16.mxu0 %v757
    %821 = vmatpush1.bf16.msra.mxu0 %v756
    %822 = vmatprep.subr.bf16.mxu0 %v759
    %823 = vmatpush1.bf16.msra.mxu0 %v758
    %824 = vmatprep.subr.bf16.mxu0 %v761
    %825 = vmatpush1.bf16.msra.mxu0 %v760
    %826 = vmatprep.subr.bf16.mxu0 %v763
    %827 = vmatpush1.bf16.msra.mxu0 %v762
    %828 = vmatprep.subr.bf16.mxu0 %v765
    %829 = vmatpush1.bf16.msra.mxu0 %v764
    %830 = vmatprep.subr.bf16.mxu0 %v767
    %831 = vmatpush1.bf16.msra.mxu0 %v766
    %832 = vmatprep.mubr.bf16.mxu0 %v595
    %833 = vmatmul.mubr.bf16.gmra.mrb[0].mxu0 %v594
    %v834 = vpop.f32.mrb[0].mxu0
    %v835 = vadd.f32 %v633, %v834
    %v836 = vpop.f32.mrb[0].mxu0
    %v837 = vadd.f32 %v637, %v836
    %v838 = vpop.f32.mrb[0].mxu0
    %v839 = vadd.f32 %v633, %v838
    %v840 = vpop.f32.mrb[0].mxu0
    %v841 = vadd.f32 %v637, %v840
    %842 = vdwg.mxu0
    %843 = vst [vmem:[#allocation8] sm:$0xff] %v835
    %844 = vst [vmem:[#allocation8 + $0x8] sm:$0xff] %v837
    %845 = vst [vmem:[#allocation8 + $0x10] sm:$0xff] %v839
    %846 = vst [vmem:[#allocation8 + $0x18] sm:$0xff] %v841
    // Predicated region
    $region34: #{tpu_custom_call.1} parent=1 // pred_check
      _
    $region35: #{tpu_custom_call.1} parent=1 // pred_check_branch
      %848 = sbr.rel (0) target = $region37
    $region36: #{tpu_custom_call.1} parent=1 // pred_region
      %s850 = ssub.s32 512, 512
      %851 = vsyncadd [#allocation4], %s850
      %s852 = sshll.u32 [#allocation8], 4
      %s853 = int_to_ptr.vmem [resolvable:$true] %s852
      %858 = dma.vmem_to_hbm [thread:$0]  %s853, 512, %s5, [#allocation4], 256, 256, 16
    $region37: #{tpu_custom_call.1} parent=1 // pred_fallthru
      _
    // Predicated region
    $region38: #{tpu_custom_call.1} parent=1 // pred_check
      _
    $region39: #{tpu_custom_call.1} parent=1 // pred_check_branch
      %860 = sbr.rel (0) target = $region41
    $region40: #{tpu_custom_call.1} parent=1 // pred_region
      %861 = dma.done [#allocation4], 512
    $region41: #{tpu_custom_call.1} parent=1 // pred_fallthru
      _
    %862 = vsyncpa [#allocation3], 1
    %863 = vsyncpa [#allocation6], 1
    %864 = vsyncpa [#allocation4], 1

</llo_original>
